<compile_context>
chip_gen: v6e
topology: v6e:2x2x1
jax: 0.10.0
libtpu: 0.0.40
codegen_flags: <defaults>
</compile_context>

<pallas_src>
import functools
import math

import jax
import jax.numpy as jnp
from jax import lax
from jax.experimental import pallas as pl
from jax.experimental.pallas import tpu as pltpu

EPS = 1e-5  # GroupNorm default eps


def _round_up(a, b):
    return ((a + b - 1) // b) * b


def _sum_all(x):
    """(A, B) -> (1, 1): lane reduce then sublane reduce (both explicit)."""
    return jnp.sum(jnp.sum(x, axis=1, keepdims=True), axis=0, keepdims=True)


def _vmem_capacity_bytes():
    """Best-effort query of per-core VMEM; conservative fallback (v7x-sized)."""
    try:
        info = pltpu.get_tpu_info()
        for name in ("vmem_capacity_bytes", "vmem_bytes"):
            cap = getattr(info, name, None)
            if cap:
                return int(cap)
    except Exception:
        pass
    return 64 << 20


# ---------------------------------------------------------------------------
# Shared in-kernel building blocks (all operate on per-sample (C, L) slabs).
# ---------------------------------------------------------------------------

def _compute_virt(x_samples_bf16, wqkv):
    """Cross-batch attention.

    x_samples_bf16: list of N arrays (C, L) bf16 (lane axis = positions).
    wqkv: (3C, C) bf16 (Wq, Wk, Wv stacked on the output-channel/sublane axis).
    Returns list of N virt arrays (C, L) f32.
    """
    n = len(x_samples_bf16)
    c = wqkv.shape[1]
    inv_sqrt_c = 1.0 / math.sqrt(c)

    qs, ks, vs = [], [], []
    for xb in x_samples_bf16:
        # Single dense 2-D MXU matmul per sample: (3C, C) x (C, L) -> (3C, L), f32 acc.
        qkv = jnp.dot(wqkv, xb, preferred_element_type=jnp.float32)
        # Sub-slices are along the *sublane* axis at multiples of C (8-aligned for the
        # shapes of interest) -> cheap vreg selection, no lane-tile-splitting slices.
        qs.append(qkv[0 * c:1 * c])
        ks.append(qkv[1 * c:2 * c])
        vs.append(qkv[2 * c:3 * c])

    virts = []
    for i in range(n):
        # scores s[i][j] (1, L): VPU multiply + sublane reduction over C.
        s = [jnp.sum(qs[i] * ks[j], axis=0, keepdims=True) * inv_sqrt_c for j in range(n)]
        m = s[0]
        for j in range(1, n):
            m = jnp.maximum(m, s[j])
        e = [jnp.exp(sj - m) for sj in s]
        denom = e[0]
        for j in range(1, n):
            denom = denom + e[j]
        inv = 1.0 / denom                      # exact softmax denominator
        # virt_i = sum_j att_ij * v_j : broadcasted VPU multiply-accumulate.
        virt_i = (e[0] * inv) * vs[0]
        for j in range(1, n):
            virt_i = virt_i + (e[j] * inv) * vs[j]
        virts.append(virt_i)
    return virts


def _finalize_sample(virt_f32, x_f32, scale, bias, wc, wo, out_dtype):
    """Folded GroupNorm affine + ReLU + Wc + residual + Wo for one sample.

    virt_f32, x_f32: (C, L) f32; scale, bias: (C, 1) f32; wc: (C, C) bf16; wo: (O, C) bf16.
    """
    vn = jnp.maximum(virt_f32 * scale + bias, 0.0)
    h = jnp.dot(wc, vn.astype(jnp.bfloat16), preferred_element_type=jnp.float32)
    # TODO(synk): nn.Dropout(0.2) is identity in eval mode; training-mode PRNG mask omitted.
    y = x_f32 + h
    out = jnp.dot(wo, y.astype(jnp.bfloat16), preferred_element_type=jnp.float32)
    return out.astype(out_dtype)


# ---------------------------------------------------------------------------
# Kernels
# ---------------------------------------------------------------------------

def _pass1_kernel(x_ref, wqkv_ref, virt_ref, stats_ref):
    """Per P-tile: QKV projections + cross-batch attention; emits virt (bf16) + GN partials.

    x_ref: (N, C, tp) f32; wqkv_ref: (3C, C) bf16
    virt_ref: (N, C, tp) bf16; stats_ref: (1, N, 2) f32 with [sum, sum-of-squares] per sample.
    """
    n = x_ref.shape[0]
    w = wqkv_ref[...]
    xs = [x_ref[i].astype(jnp.bfloat16) for i in range(n)]
    virts = _compute_virt(xs, w)

    rows = []
    for i in range(n):
        virt_ref[i] = virts[i].astype(virt_ref.dtype)
        ssum = _sum_all(virts[i])                       # (1, 1)
        ssq = _sum_all(virts[i] * virts[i])             # (1, 1)
        rows.append(jnp.concatenate([ssum, ssq], axis=1))   # (1, 2)
    stats_ref[0] = jnp.concatenate(rows, axis=0)        # (N, 2)


def _pass2_kernel(x_ref, virt_ref, scale_ref, bias_ref, wc_ref, wo_ref, out_ref):
    """Per P-tile: folded GroupNorm affine + ReLU + Wc, residual, Wo.

    x_ref: (N, C, tp) f32; virt_ref: (N, C, tp) bf16; scale/bias: (N, C, 1) f32;
    wc: (C, C) bf16; wo: (O, C) bf16; out_ref: (N, O, tp).
    """
    n = x_ref.shape[0]
    wc = wc_ref[...]
    wo = wo_ref[...]
    for i in range(n):
        out_ref[i] = _finalize_sample(virt_ref[i].astype(jnp.float32), x_ref[i],
                                      scale_ref[i], bias_ref[i], wc, wo, out_ref.dtype)


def _fused_kernel(x_ref, wqkv_ref, wc_ref, wo_ref, gamma_ref, beta_ref, out_ref, *, count):
    """Single-launch path: whole problem resident in VMEM, exact GN stats in-kernel."""
    n = x_ref.shape[0]
    w = wqkv_ref[...]
    wc = wc_ref[...]
    wo = wo_ref[...]
    gamma = gamma_ref[...]                               # (C, 1)
    beta = beta_ref[...]                                 # (C, 1)

    xs_f32 = [x_ref[i] for i in range(n)]
    virts = _compute_virt([x.astype(jnp.bfloat16) for x in xs_f32], w)

    inv_count = 1.0 / count
    for i in range(n):
        v = virts[i]
        # Padded P columns hold exactly-zero virt, so dividing by the true count is exact.
        mean = _sum_all(v) * inv_count                               # (1, 1)
        var = jnp.maximum(_sum_all(v * v) * inv_count - mean * mean, 0.0)
        rstd = lax.rsqrt(var + EPS)
        scale = rstd * gamma                                         # (C, 1)
        bias = beta - mean * scale                                   # (C, 1)
        out_ref[i] = _finalize_sample(v, xs_f32[i], scale, bias, wc, wo, out_ref.dtype)


# ---------------------------------------------------------------------------
# Wrapper
# ---------------------------------------------------------------------------

def nl_forward(x_ncthw, params, *, tile_p=None, force_tiled=False, interpret=False):
    """x_ncthw: (N, C, T, H, W) float32. Returns (N, out_dim, T, H, W)."""
    wq, wk, wv, wc, wo, gamma, beta = params
    N, C, T, H, W = x_ncthw.shape
    P = T * H * W
    O = wo.shape[0]

    # NCTHW -> (N, C, P): pure metadata reshape, no transpose.
    x = x_ncthw.reshape(N, C, P)

    # Pre-packed weights (bf16 operands, f32 MXU accumulation in-kernel).
    wqkv = jnp.concatenate([wq, wk, wv], axis=0).astype(jnp.bfloat16)   # (3C, C)
    wc_b = wc.astype(jnp.bfloat16)                                       # (C, C)
    wo_b = wo.astype(jnp.bfloat16)                                       # (O, C)

    # Rough per-position VMEM working-set bytes (incl. double buffers and f32 temporaries).
    per_p = 4 * N * (10 * C + 3 * O)
    vmem_cap = _vmem_capacity_bytes()
    small_vmem = vmem_cap <= (64 << 20)                # v7x-class chip
    budget = (12 << 20) if small_vmem else (32 << 20)
    limit_cap = (40 << 20) if small_vmem else (100 << 20)

    p128 = _round_up(P, 128)
    use_fused = (not force_tiled) and tile_p is None and (p128 * per_p <= (8 << 20))

    if use_fused:
        P_pad = p128
        x_p = jnp.pad(x, ((0, 0), (0, 0), (0, P_pad - P))) if P_pad != P else x
        gamma2 = gamma.reshape(C, 1).astype(jnp.float32)
        beta2 = beta.reshape(C, 1).astype(jnp.float32)
        vmem_limit = int(min(max(P_pad * per_p + (4 << 20), 16 << 20), limit_cap))
        cost = pl.CostEstimate(
            flops=int(P_pad * N * (6 * C * C + 2 * C * (C + O)) + P_pad * N * N * 4 * C),
            transcendentals=int(P_pad * N * N),
            bytes_accessed=int(4 * P_pad * N * (C + O) + 2 * C * (5 * C + O)))
        out = pl.pallas_call(
            functools.partial(_fused_kernel, count=float(P * C)),
            grid=(1,),
            in_specs=(
                pl.BlockSpec((N, C, P_pad), lambda g: (0, 0, 0)),
                pl.BlockSpec((3 * C, C), lambda g: (0, 0)),
                pl.BlockSpec((C, C), lambda g: (0, 0)),
                pl.BlockSpec((O, C), lambda g: (0, 0)),
                pl.BlockSpec((C, 1), lambda g: (0, 0)),
                pl.BlockSpec((C, 1), lambda g: (0, 0)),
            ),
            out_specs=pl.BlockSpec((N, O, P_pad), lambda g: (0, 0, 0)),
            out_shape=jax.ShapeDtypeStruct((N, O, P_pad), x.dtype),
            compiler_params=pltpu.CompilerParams(
                dimension_semantics=("arbitrary",), vmem_limit_bytes=vmem_limit),
            cost_estimate=cost,
            interpret=interpret,
        )(x_p, wqkv, wc_b, wo_b, gamma2, beta2)
        return out[:, :, :P].reshape(N, O, T, H, W)

    # ---------------- tiled two-pass path ----------------
    if tile_p is None:
        tp = max(128, (budget // per_p) // 128 * 128)
        if p128 >= 256:
            # Keep >= 2 grid steps so both v7x TensorCores get work (harmless on 1-TC chips).
            tp = min(tp, max(128, (p128 // 2) // 128 * 128))
    else:
        tp = max(128, (int(tile_p) // 128) * 128)
    tp = min(tp, p128)
    P_pad = _round_up(P, tp)
    num_tiles = P_pad // tp

    x_p = jnp.pad(x, ((0, 0), (0, 0), (0, P_pad - P))) if P_pad != P else x
    vmem_limit = int(min(max(tp * per_p + (4 << 20), 16 << 20), limit_cap))
    cparams = pltpu.CompilerParams(dimension_semantics=("parallel",),
                                   vmem_limit_bytes=vmem_limit)

    cost1 = pl.CostEstimate(
        flops=int(6 * P_pad * N * C * C + 4 * P_pad * N * N * C),
        transcendentals=int(P_pad * N * N),
        bytes_accessed=int(P_pad * N * C * (4 + 2) + 6 * C * C))
    virt, stats = pl.pallas_call(
        _pass1_kernel,
        grid=(num_tiles,),
        in_specs=(
            pl.BlockSpec((N, C, tp), lambda g: (0, 0, g)),      # x tile
            pl.BlockSpec((3 * C, C), lambda g: (0, 0)),         # fused Wqkv
        ),
        out_specs=(
            pl.BlockSpec((N, C, tp), lambda g: (0, 0, g)),      # virt tile (bf16)
            pl.BlockSpec((1, N, 2), lambda g: (g, 0, 0)),       # per-tile GN partial sums
        ),
        out_shape=(
            jax.ShapeDtypeStruct((N, C, P_pad), jnp.bfloat16),
            jax.ShapeDtypeStruct((num_tiles, N, 2), jnp.float32),
        ),
        compiler_params=cparams,
        cost_estimate=cost1,
        interpret=interpret,
    )(x_p, wqkv)

    # Combine per-tile partials -> per-sample mean / rstd, then fold the GroupNorm affine
    # into per-(sample, channel) scale/bias so pass 2 is a single multiply-add per element.
    totals = jnp.sum(stats, axis=0)                     # (N, 2)
    count = float(P * C)                                # true (unpadded) element count
    mean = totals[:, 0] / count
    var = jnp.maximum(totals[:, 1] / count - mean * mean, 0.0)
    rstd = lax.rsqrt(var + EPS)
    scale = (rstd[:, None] * gamma[None, :]).astype(jnp.float32).reshape(N, C, 1)
    bias = (beta[None, :] - mean[:, None] * rstd[:, None] * gamma[None, :]
            ).astype(jnp.float32).reshape(N, C, 1)

    cost2 = pl.CostEstimate(
        flops=int(2 * P_pad * N * C * (C + O)),
        transcendentals=0,
        bytes_accessed=int(P_pad * N * (4 * C + 2 * C + 4 * O) + 2 * C * (C + O)))
    out = pl.pallas_call(
        _pass2_kernel,
        grid=(num_tiles,),
        in_specs=(
            pl.BlockSpec((N, C, tp), lambda g: (0, 0, g)),      # x tile
            pl.BlockSpec((N, C, tp), lambda g: (0, 0, g)),      # virt tile (bf16)
            pl.BlockSpec((N, C, 1), lambda g: (0, 0, 0)),       # folded GN scale
            pl.BlockSpec((N, C, 1), lambda g: (0, 0, 0)),       # folded GN bias
            pl.BlockSpec((C, C), lambda g: (0, 0)),             # Wc
            pl.BlockSpec((O, C), lambda g: (0, 0)),             # Wo
        ),
        out_specs=pl.BlockSpec((N, O, tp), lambda g: (0, 0, g)),
        out_shape=jax.ShapeDtypeStruct((N, O, P_pad), x.dtype),
        compiler_params=cparams,
        cost_estimate=cost2,
        interpret=interpret,
    )(x_p, virt, scale, bias, wc_b, wo_b)

    return out[:, :, :P].reshape(N, O, T, H, W)


# ---------------------------------------------------------------------------
# Pure-JAX reference (mirrors the PyTorch math in f32)
# ---------------------------------------------------------------------------

def nl_reference(x_ncthw, params):
    wq, wk, wv, wc, wo, gamma, beta = params
    N, C, T, H, W = x_ncthw.shape
    P = T * H * W
    x = x_ncthw.reshape(N, C, P).astype(jnp.float32)
    q = jnp.einsum('oc,ncp->nop', wq, x)
    k = jnp.einsum('oc,ncp->nop', wk, x)
    v = jnp.einsum('oc,ncp->nop', wv, x)
    att = jnp.einsum('icp,jcp->ijp', q, k) / math.sqrt(C)
    att = jax.nn.softmax(att, axis=1)
    virt = jnp.einsum('ijp,jcp->icp', att, v)
    mean = jnp.mean(virt, axis=(1, 2), keepdims=True)
    var = jnp.mean((virt - mean) ** 2, axis=(1, 2), keepdims=True)
    virt = (virt - mean) / jnp.sqrt(var + EPS)
    virt = virt * gamma[None, :, None] + beta[None, :, None]
    virt = jax.nn.relu(virt)
    virt = jnp.einsum('oc,ncp->nop', wc, virt)
    y = x + virt
    out = jnp.einsum('oc,ncp->nop', wo, y)
    return out.reshape(N, -1, T, H, W)


if __name__ == "__main__":
    # Small shapes consistent with the module: hidden_dim=32, out_dim=64, batch N=2.
    N, C, O = 2, 32, 64
    key = jax.random.PRNGKey(0)
    kx1, kx2, k1, k2, k3, k4, k5, k6, k7 = jax.random.split(key, 9)

    # Conv3d 1x1x1 weights stored as (out_ch, in_ch); GroupNorm affine params (C,).
    wq = 0.05 * jax.random.normal(k1, (C, C), dtype=jnp.float32)
    wk = 0.05 * jax.random.normal(k2, (C, C), dtype=jnp.float32)
    wv = 0.05 * jax.random.normal(k3, (C, C), dtype=jnp.float32)
    wc = 0.05 * jax.random.normal(k4, (C, C), dtype=jnp.float32)
    wo = 0.05 * jax.random.normal(k5, (O, C), dtype=jnp.float32)
    gamma = 1.0 + 0.1 * jax.random.normal(k6, (C,), dtype=jnp.float32)
    beta = 0.1 * jax.random.normal(k7, (C,), dtype=jnp.float32)
    params = (wq, wk, wv, wc, wo, gamma, beta)

    # Test 1: tiny problem -> fused single-kernel path.
    T1, H1, W1 = 2, 4, 4
    x1 = jax.random.normal(kx1, (N, C, T1, H1, W1), dtype=jnp.float32)
    out1 = jax.block_until_ready(nl_forward(x1, params))
    assert out1.shape == (N, O, T1, H1, W1), out1.shape
    ref1 = nl_reference(x1, params)
    err1 = float(jnp.max(jnp.abs(out1 - ref1)))
    assert jnp.allclose(out1, ref1, rtol=1e-2, atol=1e-2), err1

    # Test 2: larger problem forced through the tiled two-pass path (2 grid tiles).
    T2, H2, W2 = 4, 8, 8
    x2 = jax.random.normal(kx2, (N, C, T2, H2, W2), dtype=jnp.float32)
    out2 = jax.block_until_ready(nl_forward(x2, params, tile_p=128, force_tiled=True))
    assert out2.shape == (N, O, T2, H2, W2), out2.shape
    ref2 = nl_reference(x2, params)
    err2 = float(jnp.max(jnp.abs(out2 - ref2)))
    assert jnp.allclose(out2, ref2, rtol=1e-2, atol=1e-2), err2

    print("KERNEL_OK")
</pallas_src>

<mosaic_0001>
module attributes {stable_mosaic.version = 11 : i64} {
  func.func @_fused_kernel(%arg0: i32, %arg1: memref<2x32x128xf32, #tpu.memory_space<vmem>>, %arg2: memref<96x32xbf16, #tpu.memory_space<vmem>>, %arg3: memref<32x32xbf16, #tpu.memory_space<vmem>>, %arg4: memref<64x32xbf16, #tpu.memory_space<vmem>>, %arg5: memref<32x1xf32, #tpu.memory_space<vmem>>, %arg6: memref<32x1xf32, #tpu.memory_space<vmem>>, %arg7: memref<2x64x128xf32, #tpu.memory_space<vmem>>) attributes {dimension_semantics = [#tpu.dimension_semantics<arbitrary>], iteration_bounds = array<i64: 1>, scalar_prefetch = 0 : i64, scratch_operands = 0 : i64, tpu.core_type = #tpu.core_type<tc>, window_params = [{pipeline_mode = #tpu.pipeline_mode<synchronous>, transform_indices = @transform_0, window_bounds = array<i64: 2, 32, 128>}, {pipeline_mode = #tpu.pipeline_mode<synchronous>, transform_indices = @transform_1, window_bounds = array<i64: 96, 32>}, {pipeline_mode = #tpu.pipeline_mode<synchronous>, transform_indices = @transform_2, window_bounds = array<i64: 32, 32>}, {pipeline_mode = #tpu.pipeline_mode<synchronous>, transform_indices = @transform_3, window_bounds = array<i64: 64, 32>}, {pipeline_mode = #tpu.pipeline_mode<synchronous>, transform_indices = @transform_4, window_bounds = array<i64: 32, 1>}, {pipeline_mode = #tpu.pipeline_mode<synchronous>, transform_indices = @transform_5, window_bounds = array<i64: 32, 1>}, {pipeline_mode = #tpu.pipeline_mode<synchronous>, transform_indices = @transform_6, window_bounds = array<i64: 2, 64, 128>}]} {
    %c0 = arith.constant 0 : index
    %c0_0 = arith.constant 0 : index
    %0 = vector.load %arg2[%c0, %c0_0] : memref<96x32xbf16, #tpu.memory_space<vmem>>, vector<96x32xbf16>
    %c0_1 = arith.constant 0 : index
    %c0_2 = arith.constant 0 : index
    %1 = vector.load %arg3[%c0_1, %c0_2] : memref<32x32xbf16, #tpu.memory_space<vmem>>, vector<32x32xbf16>
    %c0_3 = arith.constant 0 : index
    %c0_4 = arith.constant 0 : index
    %2 = vector.load %arg4[%c0_3, %c0_4] : memref<64x32xbf16, #tpu.memory_space<vmem>>, vector<64x32xbf16>
    %c0_5 = arith.constant 0 : index
    %c0_6 = arith.constant 0 : index
    %3 = vector.load %arg5[%c0_5, %c0_6] : memref<32x1xf32, #tpu.memory_space<vmem>>, vector<32x1xf32>
    %c0_7 = arith.constant 0 : index
    %c0_8 = arith.constant 0 : index
    %4 = vector.load %arg6[%c0_7, %c0_8] : memref<32x1xf32, #tpu.memory_space<vmem>>, vector<32x1xf32>
    %c0_9 = arith.constant 0 : index
    %c0_10 = arith.constant 0 : index
    %c0_11 = arith.constant 0 : index
    %5 = vector.load %arg1[%c0_9, %c0_10, %c0_11] : memref<2x32x128xf32, #tpu.memory_space<vmem>>, vector<1x32x128xf32>
    %6 = vector.shape_cast %5 : vector<1x32x128xf32> to vector<32x128xf32>
    %c1 = arith.constant 1 : index
    %c0_12 = arith.constant 0 : index
    %c0_13 = arith.constant 0 : index
    %7 = vector.load %arg1[%c1, %c0_12, %c0_13] : memref<2x32x128xf32, #tpu.memory_space<vmem>>, vector<1x32x128xf32>
    %8 = vector.shape_cast %7 : vector<1x32x128xf32> to vector<32x128xf32>
    %9 = arith.truncf %6 : vector<32x128xf32> to vector<32x128xbf16>
    %10 = arith.truncf %8 : vector<32x128xf32> to vector<32x128xbf16>
    %cst = arith.constant dense<0.000000e+00> : vector<96x128xf32>
    %11 = tpu.matmul %0, %9, %cst {dimension_numbers = #tpu.dot_dimension_numbers<[1], [0], [0], [1], [0, 0, 1, 1], [], []>} : vector<96x32xbf16>, vector<32x128xbf16>, vector<96x128xf32> -> vector<96x128xf32>
    %12 = vector.extract_strided_slice %11 {offsets = [0, 0], sizes = [32, 128], strides = [1, 1]} : vector<96x128xf32> to vector<32x128xf32>
    %13 = vector.extract_strided_slice %11 {offsets = [32, 0], sizes = [32, 128], strides = [1, 1]} : vector<96x128xf32> to vector<32x128xf32>
    %14 = vector.extract_strided_slice %11 {offsets = [64, 0], sizes = [32, 128], strides = [1, 1]} : vector<96x128xf32> to vector<32x128xf32>
    %cst_14 = arith.constant dense<0.000000e+00> : vector<96x128xf32>
    %15 = tpu.matmul %0, %10, %cst_14 {dimension_numbers = #tpu.dot_dimension_numbers<[1], [0], [0], [1], [0, 0, 1, 1], [], []>} : vector<96x32xbf16>, vector<32x128xbf16>, vector<96x128xf32> -> vector<96x128xf32>
    %16 = vector.extract_strided_slice %15 {offsets = [0, 0], sizes = [32, 128], strides = [1, 1]} : vector<96x128xf32> to vector<32x128xf32>
    %17 = vector.extract_strided_slice %15 {offsets = [32, 0], sizes = [32, 128], strides = [1, 1]} : vector<96x128xf32> to vector<32x128xf32>
    %18 = vector.extract_strided_slice %15 {offsets = [64, 0], sizes = [32, 128], strides = [1, 1]} : vector<96x128xf32> to vector<32x128xf32>
    %19 = arith.mulf %12, %13 : vector<32x128xf32>
    %cst_15 = arith.constant dense<0.000000e+00> : vector<128xf32>
    %20 = vector.multi_reduction <add>, %19, %cst_15 [0] : vector<32x128xf32> to vector<128xf32>
    %21 = vector.shape_cast %20 : vector<128xf32> to vector<1x128xf32>
    %cst_16 = arith.constant 0.176776692 : f32
    %22 = vector.broadcast %cst_16 : f32 to vector<1x128xf32>
    %23 = arith.mulf %21, %22 : vector<1x128xf32>
    %24 = arith.mulf %12, %17 : vector<32x128xf32>
    %cst_17 = arith.constant dense<0.000000e+00> : vector<128xf32>
    %25 = vector.multi_reduction <add>, %24, %cst_17 [0] : vector<32x128xf32> to vector<128xf32>
    %26 = vector.shape_cast %25 : vector<128xf32> to vector<1x128xf32>
    %cst_18 = arith.constant 0.176776692 : f32
    %27 = vector.broadcast %cst_18 : f32 to vector<1x128xf32>
    %28 = arith.mulf %26, %27 : vector<1x128xf32>
    %29 = arith.maximumf %23, %28 : vector<1x128xf32>
    %30 = arith.subf %23, %29 : vector<1x128xf32>
    %31 = math.exp %30 : vector<1x128xf32>
    %32 = arith.subf %28, %29 : vector<1x128xf32>
    %33 = math.exp %32 : vector<1x128xf32>
    %34 = arith.addf %31, %33 : vector<1x128xf32>
    %cst_19 = arith.constant 1.000000e+00 : f32
    %35 = vector.broadcast %cst_19 : f32 to vector<1x128xf32>
    %36 = arith.divf %35, %34 : vector<1x128xf32>
    %37 = arith.mulf %31, %36 : vector<1x128xf32>
    %38 = vector.broadcast %37 : vector<1x128xf32> to vector<32x128xf32>
    %39 = arith.mulf %38, %14 : vector<32x128xf32>
    %40 = arith.mulf %33, %36 : vector<1x128xf32>
    %41 = vector.broadcast %40 : vector<1x128xf32> to vector<32x128xf32>
    %42 = arith.mulf %41, %18 : vector<32x128xf32>
    %43 = arith.addf %39, %42 : vector<32x128xf32>
    %44 = arith.mulf %16, %13 : vector<32x128xf32>
    %cst_20 = arith.constant dense<0.000000e+00> : vector<128xf32>
    %45 = vector.multi_reduction <add>, %44, %cst_20 [0] : vector<32x128xf32> to vector<128xf32>
    %46 = vector.shape_cast %45 : vector<128xf32> to vector<1x128xf32>
    %cst_21 = arith.constant 0.176776692 : f32
    %47 = vector.broadcast %cst_21 : f32 to vector<1x128xf32>
    %48 = arith.mulf %46, %47 : vector<1x128xf32>
    %49 = arith.mulf %16, %17 : vector<32x128xf32>
    %cst_22 = arith.constant dense<0.000000e+00> : vector<128xf32>
    %50 = vector.multi_reduction <add>, %49, %cst_22 [0] : vector<32x128xf32> to vector<128xf32>
    %51 = vector.shape_cast %50 : vector<128xf32> to vector<1x128xf32>
    %cst_23 = arith.constant 0.176776692 : f32
    %52 = vector.broadcast %cst_23 : f32 to vector<1x128xf32>
    %53 = arith.mulf %51, %52 : vector<1x128xf32>
    %54 = arith.maximumf %48, %53 : vector<1x128xf32>
    %55 = arith.subf %48, %54 : vector<1x128xf32>
    %56 = math.exp %55 : vector<1x128xf32>
    %57 = arith.subf %53, %54 : vector<1x128xf32>
    %58 = math.exp %57 : vector<1x128xf32>
    %59 = arith.addf %56, %58 : vector<1x128xf32>
    %cst_24 = arith.constant 1.000000e+00 : f32
    %60 = vector.broadcast %cst_24 : f32 to vector<1x128xf32>
    %61 = arith.divf %60, %59 : vector<1x128xf32>
    %62 = arith.mulf %56, %61 : vector<1x128xf32>
    %63 = vector.broadcast %62 : vector<1x128xf32> to vector<32x128xf32>
    %64 = arith.mulf %63, %14 : vector<32x128xf32>
    %65 = arith.mulf %58, %61 : vector<1x128xf32>
    %66 = vector.broadcast %65 : vector<1x128xf32> to vector<32x128xf32>
    %67 = arith.mulf %66, %18 : vector<32x128xf32>
    %68 = arith.addf %64, %67 : vector<32x128xf32>
    %cst_25 = arith.constant dense<0.000000e+00> : vector<32xf32>
    %69 = vector.multi_reduction <add>, %43, %cst_25 [1] : vector<32x128xf32> to vector<32xf32>
    %70 = vector.shape_cast %69 : vector<32xf32> to vector<32x1xf32>
    %cst_26 = arith.constant dense<0.000000e+00> : vector<1xf32>
    %71 = vector.multi_reduction <add>, %70, %cst_26 [0] : vector<32x1xf32> to vector<1xf32>
    %72 = vector.shape_cast %71 : vector<1xf32> to vector<1x1xf32>
    %cst_27 = arith.constant 9.765625E-4 : f32
    %73 = vector.broadcast %cst_27 : f32 to vector<1x1xf32>
    %74 = arith.mulf %72, %73 : vector<1x1xf32>
    %75 = arith.mulf %43, %43 : vector<32x128xf32>
    %cst_28 = arith.constant dense<0.000000e+00> : vector<32xf32>
    %76 = vector.multi_reduction <add>, %75, %cst_28 [1] : vector<32x128xf32> to vector<32xf32>
    %77 = vector.shape_cast %76 : vector<32xf32> to vector<32x1xf32>
    %cst_29 = arith.constant dense<0.000000e+00> : vector<1xf32>
    %78 = vector.multi_reduction <add>, %77, %cst_29 [0] : vector<32x1xf32> to vector<1xf32>
    %79 = vector.shape_cast %78 : vector<1xf32> to vector<1x1xf32>
    %cst_30 = arith.constant 9.765625E-4 : f32
    %80 = vector.broadcast %cst_30 : f32 to vector<1x1xf32>
    %81 = arith.mulf %79, %80 : vector<1x1xf32>
    %82 = arith.mulf %74, %74 : vector<1x1xf32>
    %83 = arith.subf %81, %82 : vector<1x1xf32>
    %cst_31 = arith.constant 0.000000e+00 : f32
    %84 = vector.broadcast %cst_31 : f32 to vector<1x1xf32>
    %85 = arith.maximumf %83, %84 : vector<1x1xf32>
    %cst_32 = arith.constant 9.99999974E-6 : f32
    %86 = vector.broadcast %cst_32 : f32 to vector<1x1xf32>
    %87 = arith.addf %85, %86 : vector<1x1xf32>
    %88 = math.rsqrt %87 : vector<1x1xf32>
    %89 = vector.broadcast %88 : vector<1x1xf32> to vector<32x1xf32>
    %90 = arith.mulf %89, %3 : vector<32x1xf32>
    %91 = vector.broadcast %74 : vector<1x1xf32> to vector<32x1xf32>
    %92 = arith.mulf %91, %90 : vector<32x1xf32>
    %93 = arith.subf %4, %92 : vector<32x1xf32>
    %94 = vector.broadcast %90 : vector<32x1xf32> to vector<32x128xf32>
    %95 = arith.mulf %43, %94 : vector<32x128xf32>
    %96 = vector.broadcast %93 : vector<32x1xf32> to vector<32x128xf32>
    %97 = arith.addf %95, %96 : vector<32x128xf32>
    %cst_33 = arith.constant 0.000000e+00 : f32
    %98 = vector.broadcast %cst_33 : f32 to vector<32x128xf32>
    %99 = arith.maximumf %97, %98 : vector<32x128xf32>
    %100 = arith.truncf %99 : vector<32x128xf32> to vector<32x128xbf16>
    %cst_34 = arith.constant dense<0.000000e+00> : vector<32x128xf32>
    %101 = tpu.matmul %1, %100, %cst_34 {dimension_numbers = #tpu.dot_dimension_numbers<[1], [0], [0], [1], [0, 0, 1, 1], [], []>} : vector<32x32xbf16>, vector<32x128xbf16>, vector<32x128xf32> -> vector<32x128xf32>
    %102 = arith.addf %6, %101 : vector<32x128xf32>
    %103 = arith.truncf %102 : vector<32x128xf32> to vector<32x128xbf16>
    %cst_35 = arith.constant dense<0.000000e+00> : vector<64x128xf32>
    %104 = tpu.matmul %2, %103, %cst_35 {dimension_numbers = #tpu.dot_dimension_numbers<[1], [0], [0], [1], [0, 0, 1, 1], [], []>} : vector<64x32xbf16>, vector<32x128xbf16>, vector<64x128xf32> -> vector<64x128xf32>
    %c0_36 = arith.constant 0 : index
    %c0_37 = arith.constant 0 : index
    %c0_38 = arith.constant 0 : index
    %105 = vector.load %arg7[%c0_36, %c0_37, %c0_38] : memref<2x64x128xf32, #tpu.memory_space<vmem>>, vector<1x64x128xf32>
    %106 = vector.shape_cast %105 : vector<1x64x128xf32> to vector<64x128xf32>
    %107 = vector.shape_cast %104 : vector<64x128xf32> to vector<1x64x128xf32>
    tpu.vector_store %arg7[%c0_36, %c0_37, %c0_38], %107 {strides = array<i32>} : memref<2x64x128xf32, #tpu.memory_space<vmem>>, vector<1x64x128xf32>,
    %cst_39 = arith.constant dense<0.000000e+00> : vector<32xf32>
    %108 = vector.multi_reduction <add>, %68, %cst_39 [1] : vector<32x128xf32> to vector<32xf32>
    %109 = vector.shape_cast %108 : vector<32xf32> to vector<32x1xf32>
    %cst_40 = arith.constant dense<0.000000e+00> : vector<1xf32>
    %110 = vector.multi_reduction <add>, %109, %cst_40 [0] : vector<32x1xf32> to vector<1xf32>
    %111 = vector.shape_cast %110 : vector<1xf32> to vector<1x1xf32>
    %cst_41 = arith.constant 9.765625E-4 : f32
    %112 = vector.broadcast %cst_41 : f32 to vector<1x1xf32>
    %113 = arith.mulf %111, %112 : vector<1x1xf32>
    %114 = arith.mulf %68, %68 : vector<32x128xf32>
    %cst_42 = arith.constant dense<0.000000e+00> : vector<32xf32>
    %115 = vector.multi_reduction <add>, %114, %cst_42 [1] : vector<32x128xf32> to vector<32xf32>
    %116 = vector.shape_cast %115 : vector<32xf32> to vector<32x1xf32>
    %cst_43 = arith.constant dense<0.000000e+00> : vector<1xf32>
    %117 = vector.multi_reduction <add>, %116, %cst_43 [0] : vector<32x1xf32> to vector<1xf32>
    %118 = vector.shape_cast %117 : vector<1xf32> to vector<1x1xf32>
    %cst_44 = arith.constant 9.765625E-4 : f32
    %119 = vector.broadcast %cst_44 : f32 to vector<1x1xf32>
    %120 = arith.mulf %118, %119 : vector<1x1xf32>
    %121 = arith.mulf %113, %113 : vector<1x1xf32>
    %122 = arith.subf %120, %121 : vector<1x1xf32>
    %cst_45 = arith.constant 0.000000e+00 : f32
    %123 = vector.broadcast %cst_45 : f32 to vector<1x1xf32>
    %124 = arith.maximumf %122, %123 : vector<1x1xf32>
    %cst_46 = arith.constant 9.99999974E-6 : f32
    %125 = vector.broadcast %cst_46 : f32 to vector<1x1xf32>
    %126 = arith.addf %124, %125 : vector<1x1xf32>
    %127 = math.rsqrt %126 : vector<1x1xf32>
    %128 = vector.broadcast %127 : vector<1x1xf32> to vector<32x1xf32>
    %129 = arith.mulf %128, %3 : vector<32x1xf32>
    %130 = vector.broadcast %113 : vector<1x1xf32> to vector<32x1xf32>
    %131 = arith.mulf %130, %129 : vector<32x1xf32>
    %132 = arith.subf %4, %131 : vector<32x1xf32>
    %133 = vector.broadcast %129 : vector<32x1xf32> to vector<32x128xf32>
    %134 = arith.mulf %68, %133 : vector<32x128xf32>
    %135 = vector.broadcast %132 : vector<32x1xf32> to vector<32x128xf32>
    %136 = arith.addf %134, %135 : vector<32x128xf32>
    %cst_47 = arith.constant 0.000000e+00 : f32
    %137 = vector.broadcast %cst_47 : f32 to vector<32x128xf32>
    %138 = arith.maximumf %136, %137 : vector<32x128xf32>
    %139 = arith.truncf %138 : vector<32x128xf32> to vector<32x128xbf16>
    %cst_48 = arith.constant dense<0.000000e+00> : vector<32x128xf32>
    %140 = tpu.matmul %1, %139, %cst_48 {dimension_numbers = #tpu.dot_dimension_numbers<[1], [0], [0], [1], [0, 0, 1, 1], [], []>} : vector<32x32xbf16>, vector<32x128xbf16>, vector<32x128xf32> -> vector<32x128xf32>
    %141 = arith.addf %8, %140 : vector<32x128xf32>
    %142 = arith.truncf %141 : vector<32x128xf32> to vector<32x128xbf16>
    %cst_49 = arith.constant dense<0.000000e+00> : vector<64x128xf32>
    %143 = tpu.matmul %2, %142, %cst_49 {dimension_numbers = #tpu.dot_dimension_numbers<[1], [0], [0], [1], [0, 0, 1, 1], [], []>} : vector<64x32xbf16>, vector<32x128xbf16>, vector<64x128xf32> -> vector<64x128xf32>
    %c1_50 = arith.constant 1 : index
    %c0_51 = arith.constant 0 : index
    %c0_52 = arith.constant 0 : index
    %144 = vector.load %arg7[%c1_50, %c0_51, %c0_52] : memref<2x64x128xf32, #tpu.memory_space<vmem>>, vector<1x64x128xf32>
    %145 = vector.shape_cast %144 : vector<1x64x128xf32> to vector<64x128xf32>
    %146 = vector.shape_cast %143 : vector<64x128xf32> to vector<1x64x128xf32>
    tpu.vector_store %arg7[%c1_50, %c0_51, %c0_52], %146 {strides = array<i32>} : memref<2x64x128xf32, #tpu.memory_space<vmem>>, vector<1x64x128xf32>,
    return
  }
  func.func @transform_0(%arg0: i32) -> (i32, i32, i32) {
    %c0_i32 = arith.constant 0 : i32
    %c0_i32_0 = arith.constant 0 : i32
    %c0_i32_1 = arith.constant 0 : i32
    %c0_i32_2 = arith.constant 0 : i32
    return %c0_i32, %c0_i32_0, %c0_i32_1 : i32, i32, i32
  }
  func.func @transform_1(%arg0: i32) -> (i32, i32) {
    %c0_i32 = arith.constant 0 : i32
    %c0_i32_0 = arith.constant 0 : i32
    %c0_i32_1 = arith.constant 0 : i32
    return %c0_i32, %c0_i32_0 : i32, i32
  }
  func.func @transform_2(%arg0: i32) -> (i32, i32) {
    %c0_i32 = arith.constant 0 : i32
    %c0_i32_0 = arith.constant 0 : i32
    %c0_i32_1 = arith.constant 0 : i32
    return %c0_i32, %c0_i32_0 : i32, i32
  }
  func.func @transform_3(%arg0: i32) -> (i32, i32) {
    %c0_i32 = arith.constant 0 : i32
    %c0_i32_0 = arith.constant 0 : i32
    %c0_i32_1 = arith.constant 0 : i32
    return %c0_i32, %c0_i32_0 : i32, i32
  }
  func.func @transform_4(%arg0: i32) -> (i32, i32) {
    %c0_i32 = arith.constant 0 : i32
    %c0_i32_0 = arith.constant 0 : i32
    %c0_i32_1 = arith.constant 0 : i32
    return %c0_i32, %c0_i32_0 : i32, i32
  }
  func.func @transform_5(%arg0: i32) -> (i32, i32) {
    %c0_i32 = arith.constant 0 : i32
    %c0_i32_0 = arith.constant 0 : i32
    %c0_i32_1 = arith.constant 0 : i32
    return %c0_i32, %c0_i32_0 : i32, i32
  }
  func.func @transform_6(%arg0: i32) -> (i32, i32, i32) {
    %c0_i32 = arith.constant 0 : i32
    %c0_i32_0 = arith.constant 0 : i32
    %c0_i32_1 = arith.constant 0 : i32
    %c0_i32_2 = arith.constant 0 : i32
    return %c0_i32, %c0_i32_0, %c0_i32_1 : i32, i32, i32
  }
}

</mosaic_0001>

<llo_original>
// kernel: tpu_custom_call.1
$region0: #{tpu_custom_call.1}
  #allocation0 [shape = 'u32[]', space=smem, size = 0x4, offset = 0x4, fixed_abs, tag = 'smem constant byte address 0x4 - core index']
  #allocation1 [shape = 'u32[144,128]{1,0:T(1,128)}', space=vmem, size = 0x12000, scoped, tag = 'internal scratch']
  %s0 = inlined_call_operand.vmem [shape: f32[2,32,128], index: 0, kind: input, shape index: {}]
  %s1 = inlined_call_operand.vmem [shape: bf16[96,32], index: 1, kind: input, shape index: {}]
  %s2 = inlined_call_operand.vmem [shape: bf16[32,32], index: 2, kind: input, shape index: {}]
  %s3 = inlined_call_operand.vmem [shape: bf16[64,32], index: 3, kind: input, shape index: {}]
  %s4 = inlined_call_operand.vmem [shape: f32[32,1], index: 4, kind: input, shape index: {}]
  %s5 = inlined_call_operand.vmem [shape: f32[32,1], index: 5, kind: input, shape index: {}]
  %s6 = inlined_call_operand.hbm [shape: f32[2,64,128], index: 6, kind: output, shape index: {}]
  %s7 = sld [smem:[#allocation0]]
  $region34: #{tpu_custom_call.1} parent=0
    _
  %s9 = ssub.s32 1, %s7
  %s10 = scalar_select 0, %s9, %s7
  $region1: #{tpu_custom_call.1} parent=0
    #allocation2 [shape = 'u8[65536]{0}', space=vmem, size = 0x10000, scoped, tag = 'output window, operand 0, single buffered']
    #allocation3 [shape = 's32[1]{0}', space=sflag, size = 0x4, scoped, tag = 'scoped memory for tpu_custom_call.1']
    %11 = vsyncpa [#allocation3], 0
    // Predicated region
    $region2: #{tpu_custom_call.1} parent=1 // pred_check
      _
    $region3: #{tpu_custom_call.1} parent=1 // pred_check_branch
      %13 = sbr.rel (0) target = $region5
    $region4: #{tpu_custom_call.1} parent=1 // pred_region
      _
    $region5: #{tpu_custom_call.1} parent=1 // pred_fallthru
      _
    // Predicated region
    $region6: #{tpu_custom_call.1} parent=1 // pred_check
      _
    $region7: #{tpu_custom_call.1} parent=1 // pred_check_branch
      %15 = sbr.rel (0) target = $region9
    $region8: #{tpu_custom_call.1} parent=1 // pred_region
      _
    $region9: #{tpu_custom_call.1} parent=1 // pred_fallthru
      _
    // Predicated region
    $region10: #{tpu_custom_call.1} parent=1 // pred_check
      _
    $region11: #{tpu_custom_call.1} parent=1 // pred_check_branch
      %17 = sbr.rel (0) target = $region13
    $region12: #{tpu_custom_call.1} parent=1 // pred_region
      _
    $region13: #{tpu_custom_call.1} parent=1 // pred_fallthru
      _
    // Predicated region
    $region14: #{tpu_custom_call.1} parent=1 // pred_check
      _
    $region15: #{tpu_custom_call.1} parent=1 // pred_check_branch
      %19 = sbr.rel (0) target = $region17
    $region16: #{tpu_custom_call.1} parent=1 // pred_region
      _
    $region17: #{tpu_custom_call.1} parent=1 // pred_fallthru
      _
    // Predicated region
    $region18: #{tpu_custom_call.1} parent=1 // pred_check
      _
    $region19: #{tpu_custom_call.1} parent=1 // pred_check_branch
      %21 = sbr.rel (0) target = $region21
    $region20: #{tpu_custom_call.1} parent=1 // pred_region
      _
    $region21: #{tpu_custom_call.1} parent=1 // pred_fallthru
      _
    // Predicated region
    $region22: #{tpu_custom_call.1} parent=1 // pred_check
      _
    $region23: #{tpu_custom_call.1} parent=1 // pred_check_branch
      %23 = sbr.rel (0) target = $region25
    $region24: #{tpu_custom_call.1} parent=1 // pred_region
      _
    $region25: #{tpu_custom_call.1} parent=1 // pred_fallthru
      _
    %v25 = vld [vmem:[%s1] sm:$0xf]
    %v26 = vld [vmem:[%s1 + $0x4] sm:$0xf]
    %v27 = vld [vmem:[%s1 + $0x8] sm:$0xf]
    %v28 = vld [vmem:[%s1 + $0xc] sm:$0xf]
    %v29 = vld [vmem:[%s1 + $0x10] sm:$0xf]
    %v30 = vld [vmem:[%s1 + $0x14] sm:$0xf]
    %v31 = vld [vmem:[%s1 + $0x18] sm:$0xf]
    %v32 = vld [vmem:[%s1 + $0x1c] sm:$0xf]
    %v33 = vld [vmem:[%s1 + $0x20] sm:$0xf]
    %v34 = vld [vmem:[%s1 + $0x24] sm:$0xf]
    %v35 = vld [vmem:[%s1 + $0x28] sm:$0xf]
    %v36 = vld [vmem:[%s1 + $0x2c] sm:$0xf]
    %v37 = vld [vmem:[%s2] sm:$0xf]
    %v38 = vld [vmem:[%s2 + $0x4] sm:$0xf]
    %v39 = vld [vmem:[%s2 + $0x8] sm:$0xf]
    %v40 = vld [vmem:[%s2 + $0xc] sm:$0xf]
    %v41 = vld [vmem:[%s3] sm:$0xf]
    %v42 = vld [vmem:[%s3 + $0x4] sm:$0xf]
    %v43 = vld [vmem:[%s3 + $0x8] sm:$0xf]
    %v44 = vld [vmem:[%s3 + $0xc] sm:$0xf]
    %v45 = vld [vmem:[%s3 + $0x10] sm:$0xf]
    %v46 = vld [vmem:[%s3 + $0x14] sm:$0xf]
    %v47 = vld [vmem:[%s3 + $0x18] sm:$0xf]
    %v48 = vld [vmem:[%s3 + $0x1c] sm:$0xf]
    %v49 = vld [vmem:[%s4] sm:$0xff]
    %v50 = vld [vmem:[%s4 + $0x8] sm:$0xff]
    %v51 = vld [vmem:[%s4 + $0x10] sm:$0xff]
    %v52 = vld [vmem:[%s4 + $0x18] sm:$0xff]
    %v53 = vld [vmem:[%s5] sm:$0xff]
    %v54 = vld [vmem:[%s5 + $0x8] sm:$0xff]
    %v55 = vld [vmem:[%s5 + $0x10] sm:$0xff]
    %v56 = vld [vmem:[%s5 + $0x18] sm:$0xff]
    %v57 = vld [vmem:[%s0] sm:$0xff]
    %v58 = vld [vmem:[%s0 + $0x8] sm:$0xff]
    %v59 = vld [vmem:[%s0 + $0x10] sm:$0xff]
    %v60 = vld [vmem:[%s0 + $0x18] sm:$0xff]
    %s61 = scalar_lea.vmem %s0, 32
    %v62 = vld [vmem:[%s61] sm:$0xff]
    %v63 = vld [vmem:[%s61 + $0x8] sm:$0xff]
    %v64 = vld [vmem:[%s61 + $0x10] sm:$0xff]
    %v65 = vld [vmem:[%s61 + $0x18] sm:$0xff]
    %v66 = vpack.c.bf16 %v58, %v57
    %v67 = vpack.c.bf16 %v60, %v59
    %v68 = vpack.c.bf16 %v63, %v62
    %v69 = vpack.c.bf16 %v65, %v64
    %v82 = vunpack.c.l.b16 %v25
    %v83 = vunpack.c.l.b16 %v26
    %v84 = vunpack.c.l.b16 %v27
    %v85 = vunpack.c.l.b16 %v28
    %v86 = vunpack.c.l.b16 %v29
    %v87 = vunpack.c.l.b16 %v30
    %v88 = vunpack.c.l.b16 %v31
    %v89 = vunpack.c.l.b16 %v32
    %v90 = vunpack.c.l.b16 %v33
    %v91 = vunpack.c.l.b16 %v34
    %v92 = vunpack.c.l.b16 %v35
    %v93 = vunpack.c.l.b16 %v36
    %v94 = vpack.c.b16 %v83, %v82
    %v95 = vpack.c.b16 %v85, %v84
    %v96 = vpack.c.b16 %v87, %v86
    %v97 = vpack.c.b16 %v89, %v88
    %v98 = vpack.c.b16 %v91, %v90
    %v99 = vpack.c.b16 %v93, %v92
    %vm100 = vcmask 261120
    %v102 = vsel %vm100, %v94, 0
    %v105 = vsel %vm100, %v95, 0
    %v108 = vsel %vm100, %v96, 0
    %v111 = vsel %vm100, %v97, 0
    %v114 = vsel %vm100, %v98, 0
    %v117 = vsel %vm100, %v99, 0
    %119 = vmatprep.subr.bf16.mxu0 0
    %120 = vmatpush1.bf16.msra.mxu0 0
    %121 = vmatprep.subr.bf16.mxu0 0
    %122 = vmatpush1.bf16.msra.mxu0 0
    %123 = vmatprep.subr.bf16.mxu0 0
    %124 = vmatpush1.bf16.msra.mxu0 0
    %125 = vmatprep.subr.bf16.mxu0 0
    %126 = vmatpush1.bf16.msra.mxu0 0
    %127 = vmatprep.subr.bf16.mxu0 0
    %128 = vmatpush1.bf16.msra.mxu0 0
    %129 = vmatprep.subr.bf16.mxu0 0
    %130 = vmatpush1.bf16.msra.mxu0 0
    %131 = vmatprep.subr.bf16.mxu0 0
    %132 = vmatpush1.bf16.msra.mxu0 %v67
    %133 = vmatprep.subr.bf16.mxu0 0
    %134 = vmatpush1.bf16.msra.mxu0 %v66
    %135 = vmatprep.subr.bf16.mxu0 0
    %136 = vmatpush2.bf16.msra.mxu0 0
    %137 = vmatprep.subr.bf16.mxu0 0
    %138 = vmatpush2.bf16.msra.mxu0 0
    %139 = vmatprep.subr.bf16.mxu0 0
    %140 = vmatpush2.bf16.msra.mxu0 0
    %141 = vmatprep.subr.bf16.mxu0 0
    %142 = vmatpush2.bf16.msra.mxu0 0
    %143 = vmatprep.subr.bf16.mxu0 0
    %144 = vmatpush2.bf16.msra.mxu0 0
    %145 = vmatprep.subr.bf16.mxu0 0
    %146 = vmatpush2.bf16.msra.mxu0 0
    %147 = vmatprep.subr.bf16.mxu0 0
    %148 = vmatpush2.bf16.msra.mxu0 0
    %149 = vmatprep.subr.bf16.mxu0 0
    %150 = vmatpush2.bf16.msra.mxu0 0
    %151 = vmatprep.mubr.bf16.mxu0 0
    %152 = vmatmul.mubr.bf16.gmra.mxu0 %v102
    %v153 = vpop.f32.mrf.mxu0
    %v154 = vadd.f32 0.0, %v153
    %v155 = vpop.f32.mrf.mxu0
    %v156 = vpop.f32.mrf.mxu0
    %v157 = vadd.f32 0.0, %v156
    %v158 = vpop.f32.mrf.mxu0
    %159 = vmatprep.mubr.bf16.mxu0 0
    %160 = vmatmul.mubr.bf16.gmra.mxu0 %v105
    %v161 = vpop.f32.mrf.mxu0
    %v162 = vadd.f32 0.0, %v161
    %v163 = vpop.f32.mrf.mxu0
    %v164 = vpop.f32.mrf.mxu0
    %v165 = vadd.f32 0.0, %v164
    %v166 = vpop.f32.mrf.mxu0
    %167 = vmatprep.mubr.bf16.mxu0 0
    %168 = vmatmul.mubr.bf16.gmra.mxu0 %v108
    %v169 = vpop.f32.mrf.mxu0
    %v170 = vadd.f32 0.0, %v169
    %v171 = vpop.f32.mrf.mxu0
    %v172 = vpop.f32.mrf.mxu0
    %v173 = vadd.f32 0.0, %v172
    %v174 = vpop.f32.mrf.mxu0
    %175 = vmatprep.mubr.bf16.mxu0 0
    %176 = vmatmul.mubr.bf16.gmra.mxu0 %v111
    %v177 = vpop.f32.mrf.mxu0
    %v178 = vadd.f32 0.0, %v177
    %v179 = vpop.f32.mrf.mxu0
    %v180 = vpop.f32.mrf.mxu0
    %v181 = vadd.f32 0.0, %v180
    %v182 = vpop.f32.mrf.mxu0
    %183 = vmatprep.mubr.bf16.mxu0 0
    %184 = vmatmul.mubr.bf16.gmra.mxu0 %v114
    %v185 = vpop.f32.mrf.mxu0
    %v186 = vadd.f32 0.0, %v185
    %v187 = vpop.f32.mrf.mxu0
    %v188 = vpop.f32.mrf.mxu0
    %v189 = vadd.f32 0.0, %v188
    %v190 = vpop.f32.mrf.mxu0
    %191 = vmatprep.mubr.bf16.mxu0 0
    %192 = vmatmul.mubr.bf16.gmra.mxu0 %v117
    %v193 = vpop.f32.mrf.mxu0
    %v194 = vadd.f32 0.0, %v193
    %v195 = vpop.f32.mrf.mxu0
    %v196 = vpop.f32.mrf.mxu0
    %v197 = vadd.f32 0.0, %v196
    %v198 = vpop.f32.mrf.mxu0
    %199 = vdwg.mxu0
    %200 = vmatprep.subr.bf16.mxu0 0
    %201 = vmatpush1.bf16.msra.mxu0 0
    %202 = vmatprep.subr.bf16.mxu0 0
    %203 = vmatpush1.bf16.msra.mxu0 0
    %204 = vmatprep.subr.bf16.mxu0 0
    %205 = vmatpush1.bf16.msra.mxu0 0
    %206 = vmatprep.subr.bf16.mxu0 0
    %207 = vmatpush1.bf16.msra.mxu0 0
    %208 = vmatprep.subr.bf16.mxu0 0
    %209 = vmatpush1.bf16.msra.mxu0 0
    %210 = vmatprep.subr.bf16.mxu0 0
    %211 = vmatpush1.bf16.msra.mxu0 0
    %212 = vmatprep.subr.bf16.mxu0 0
    %213 = vmatpush1.bf16.msra.mxu0 %v69
    %214 = vmatprep.subr.bf16.mxu0 0
    %215 = vmatpush1.bf16.msra.mxu0 %v68
    %216 = vmatprep.subr.bf16.mxu0 0
    %217 = vmatpush2.bf16.msra.mxu0 0
    %218 = vmatprep.subr.bf16.mxu0 0
    %219 = vmatpush2.bf16.msra.mxu0 0
    %220 = vmatprep.subr.bf16.mxu0 0
    %221 = vmatpush2.bf16.msra.mxu0 0
    %222 = vmatprep.subr.bf16.mxu0 0
    %223 = vmatpush2.bf16.msra.mxu0 0
    %224 = vmatprep.subr.bf16.mxu0 0
    %225 = vmatpush2.bf16.msra.mxu0 0
    %226 = vmatprep.subr.bf16.mxu0 0
    %227 = vmatpush2.bf16.msra.mxu0 0
    %228 = vmatprep.subr.bf16.mxu0 0
    %229 = vmatpush2.bf16.msra.mxu0 0
    %230 = vmatprep.subr.bf16.mxu0 0
    %231 = vmatpush2.bf16.msra.mxu0 0
    %232 = vmatprep.mubr.bf16.mxu0 0
    %233 = vmatmul.mubr.bf16.gmra.mxu0 %v102
    %v234 = vpop.f32.mrf.mxu0
    %v235 = vadd.f32 0.0, %v234
    %v236 = vpop.f32.mrf.mxu0
    %v237 = vpop.f32.mrf.mxu0
    %v238 = vadd.f32 0.0, %v237
    %v239 = vpop.f32.mrf.mxu0
    %240 = vmatprep.mubr.bf16.mxu0 0
    %241 = vmatmul.mubr.bf16.gmra.mxu0 %v105
    %v242 = vpop.f32.mrf.mxu0
    %v243 = vadd.f32 0.0, %v242
    %v244 = vpop.f32.mrf.mxu0
    %v245 = vpop.f32.mrf.mxu0
    %v246 = vadd.f32 0.0, %v245
    %v247 = vpop.f32.mrf.mxu0
    %248 = vmatprep.mubr.bf16.mxu0 0
    %249 = vmatmul.mubr.bf16.gmra.mxu0 %v108
    %v250 = vpop.f32.mrf.mxu0
    %v251 = vadd.f32 0.0, %v250
    %v252 = vpop.f32.mrf.mxu0
    %v253 = vpop.f32.mrf.mxu0
    %v254 = vadd.f32 0.0, %v253
    %v255 = vpop.f32.mrf.mxu0
    %256 = vmatprep.mubr.bf16.mxu0 0
    %257 = vmatmul.mubr.bf16.gmra.mxu0 %v111
    %v258 = vpop.f32.mrf.mxu0
    %v259 = vadd.f32 0.0, %v258
    %v260 = vpop.f32.mrf.mxu0
    %v261 = vpop.f32.mrf.mxu0
    %v262 = vadd.f32 0.0, %v261
    %v263 = vpop.f32.mrf.mxu0
    %264 = vmatprep.mubr.bf16.mxu0 0
    %265 = vmatmul.mubr.bf16.gmra.mxu0 %v114
    %v266 = vpop.f32.mrf.mxu0
    %v267 = vadd.f32 0.0, %v266
    %v268 = vpop.f32.mrf.mxu0
    %v269 = vpop.f32.mrf.mxu0
    %v270 = vadd.f32 0.0, %v269
    %v271 = vpop.f32.mrf.mxu0
    %272 = vmatprep.mubr.bf16.mxu0 0
    %273 = vmatmul.mubr.bf16.gmra.mxu0 %v117
    %v274 = vpop.f32.mrf.mxu0
    %v275 = vadd.f32 0.0, %v274
    %v276 = vpop.f32.mrf.mxu0
    %v277 = vpop.f32.mrf.mxu0
    %v278 = vadd.f32 0.0, %v277
    %v279 = vpop.f32.mrf.mxu0
    %280 = vdwg.mxu0
    %v281 = vmul.f32 %v154, %v170
    %v282 = vmul.f32 %v157, %v173
    %v283 = vmul.f32 %v162, %v178
    %v284 = vmul.f32 %v165, %v181
    %v285 = vadd.f32 %v281, %v282
    %v286 = vadd.f32 %v285, %v283
    %v287 = vadd.f32 %v286, %v284
    %v288 = vrot.slane %v287, 4
    %v289 = vadd.f32 %v287, %v288
    %v290 = vrot.slane %v289, 2
    %v291 = vadd.f32 %v289, %v290
    %v292 = vrot.slane %v291, 1
    %v293 = vadd.f32 %v291, %v292
    %v294 = vmul.f32 %v293, 0.17677669
    %v295 = vmul.f32 %v154, %v251
    %v296 = vmul.f32 %v157, %v254
    %v297 = vmul.f32 %v162, %v259
    %v298 = vmul.f32 %v165, %v262
    %v299 = vadd.f32 %v295, %v296
    %v300 = vadd.f32 %v299, %v297
    %v301 = vadd.f32 %v300, %v298
    %v302 = vrot.slane %v301, 4
    %v303 = vadd.f32 %v301, %v302
    %v304 = vrot.slane %v303, 2
    %v305 = vadd.f32 %v303, %v304
    %v306 = vrot.slane %v305, 1
    %v307 = vadd.f32 %v305, %v306
    %v308 = vmul.f32 %v307, 0.17677669
    %v309 = vmax.f32 %v294, %v308
    %v310 = vsub.f32 %v294, %v309
    %v311 = vmul.f32 %v310, 1.442695
    %v312 = vpow.pop %v311
    %v313 = vsub.f32 %v308, %v309
    %v314 = vmul.f32 %v313, 1.442695
    %v315 = vpow.pop %v314
    %v316 = vadd.f32 %v312, %v315
    %v317 = vrcp.pop %v316
    %v318 = vmul.f32 1.0, %v317
    %v319 = vmul.f32 %v312, %v318
    %v320 = vmul.f32 %v319, %v186
    %v321 = vmul.f32 %v319, %v189
    %v322 = vmul.f32 %v319, %v194
    %v323 = vmul.f32 %v319, %v197
    %v324 = vmul.f32 %v315, %v318
    %v325 = vmul.f32 %v324, %v267
    %v326 = vmul.f32 %v324, %v270
    %v327 = vmul.f32 %v324, %v275
    %v328 = vmul.f32 %v324, %v278
    %v329 = vadd.f32 %v320, %v325
    %v330 = vadd.f32 %v321, %v326
    %v331 = vadd.f32 %v322, %v327
    %v332 = vadd.f32 %v323, %v328
    %v333 = vmul.f32 %v235, %v170
    %v334 = vmul.f32 %v238, %v173
    %v335 = vmul.f32 %v243, %v178
    %v336 = vmul.f32 %v246, %v181
    %v337 = vadd.f32 %v333, %v334
    %v338 = vadd.f32 %v337, %v335
    %v339 = vadd.f32 %v338, %v336
    %v340 = vrot.slane %v339, 4
    %v341 = vadd.f32 %v339, %v340
    %v342 = vrot.slane %v341, 2
    %v343 = vadd.f32 %v341, %v342
    %v344 = vrot.slane %v343, 1
    %v345 = vadd.f32 %v343, %v344
    %v346 = vmul.f32 %v345, 0.17677669
    %v347 = vmul.f32 %v235, %v251
    %v348 = vmul.f32 %v238, %v254
    %v349 = vmul.f32 %v243, %v259
    %v350 = vmul.f32 %v246, %v262
    %v351 = vadd.f32 %v347, %v348
    %v352 = vadd.f32 %v351, %v349
    %v353 = vadd.f32 %v352, %v350
    %v354 = vrot.slane %v353, 4
    %v355 = vadd.f32 %v353, %v354
    %v356 = vrot.slane %v355, 2
    %v357 = vadd.f32 %v355, %v356
    %v358 = vrot.slane %v357, 1
    %v359 = vadd.f32 %v357, %v358
    %v360 = vmul.f32 %v359, 0.17677669
    %v361 = vmax.f32 %v346, %v360
    %v362 = vsub.f32 %v346, %v361
    %v363 = vmul.f32 %v362, 1.442695
    %v364 = vpow.pop %v363
    %v365 = vsub.f32 %v360, %v361
    %v366 = vmul.f32 %v365, 1.442695
    %v367 = vpow.pop %v366
    %v368 = vadd.f32 %v364, %v367
    %v369 = vrcp.pop %v368
    %v370 = vmul.f32 1.0, %v369
    %v371 = vmul.f32 %v364, %v370
    %v372 = vmul.f32 %v371, %v186
    %v373 = vmul.f32 %v371, %v189
    %v374 = vmul.f32 %v371, %v194
    %v375 = vmul.f32 %v371, %v197
    %v376 = vmul.f32 %v367, %v370
    %v377 = vmul.f32 %v376, %v267
    %v378 = vmul.f32 %v376, %v270
    %v379 = vmul.f32 %v376, %v275
    %v380 = vmul.f32 %v376, %v278
    %v381 = vadd.f32 %v372, %v377
    %v382 = vadd.f32 %v373, %v378
    %v383 = vadd.f32 %v374, %v379
    %v384 = vadd.f32 %v375, %v380
    %385 = vadd.xlane.f32.xlu0 %v329
    %v386 = vpop.xlane.xlu0 %385
    %387 = vadd.xlane.f32.xlu0 %v330
    %v388 = vpop.xlane.xlu0 %387
    %389 = vadd.xlane.f32.xlu0 %v331
    %v390 = vpop.xlane.xlu0 %389
    %391 = vadd.xlane.f32.xlu0 %v332
    %v392 = vpop.xlane.xlu0 %391
    %v393 = vadd.f32 %v386, %v388
    %v394 = vadd.f32 %v393, %v390
    %v395 = vadd.f32 %v394, %v392
    %v396 = vrot.slane %v395, 4
    %v397 = vadd.f32 %v395, %v396
    %v398 = vrot.slane %v397, 2
    %v399 = vadd.f32 %v397, %v398
    %v400 = vrot.slane %v399, 1
    %v401 = vadd.f32 %v399, %v400
    %v402 = vmul.f32 %v401, 0.0009765625
    %v403 = vmul.f32 %v329, %v329
    %v404 = vmul.f32 %v330, %v330
    %v405 = vmul.f32 %v331, %v331
    %v406 = vmul.f32 %v332, %v332
    %407 = vadd.xlane.f32.xlu0 %v403
    %v408 = vpop.xlane.xlu0 %407
    %409 = vadd.xlane.f32.xlu0 %v404
    %v410 = vpop.xlane.xlu0 %409
    %411 = vadd.xlane.f32.xlu0 %v405
    %v412 = vpop.xlane.xlu0 %411
    %413 = vadd.xlane.f32.xlu0 %v406
    %v414 = vpop.xlane.xlu0 %413
    %v415 = vadd.f32 %v408, %v410
    %v416 = vadd.f32 %v415, %v412
    %v417 = vadd.f32 %v416, %v414
    %v418 = vrot.slane %v417, 4
    %v419 = vadd.f32 %v417, %v418
    %v420 = vrot.slane %v419, 2
    %v421 = vadd.f32 %v419, %v420
    %v422 = vrot.slane %v421, 1
    %v423 = vadd.f32 %v421, %v422
    %v424 = vmul.f32 %v423, 0.0009765625
    %v425 = vmul.f32 %v402, %v402
    %v426 = vsub.f32 %v424, %v425
    %v427 = vmax.f32 %v426, 0.0
    %v428 = vadd.f32 %v427, 1e-05
    %v429 = vrsqrt.pop %v428
    %v430 = vmul.f32 %v429, %v49
    %v431 = vmul.f32 %v429, %v50
    %v432 = vmul.f32 %v429, %v51
    %v433 = vmul.f32 %v429, %v52
    %v434 = vmul.f32 %v402, %v430
    %v435 = vmul.f32 %v402, %v431
    %v436 = vmul.f32 %v402, %v432
    %v437 = vmul.f32 %v402, %v433
    %v438 = vsub.f32 %v53, %v434
    %v439 = vsub.f32 %v54, %v435
    %v440 = vsub.f32 %v55, %v436
    %v441 = vsub.f32 %v56, %v437
    %443 = vset.pattern.permute.xlu0 0
    %444 = vperm.xlu0 %443, %v430
    %v445 = vpop.permute.xlu0 %444
    %448 = vset.pattern.permute.xlu0 0
    %449 = vperm.xlu0 %448, %v431
    %v450 = vpop.permute.xlu0 %449
    %453 = vset.pattern.permute.xlu0 0
    %454 = vperm.xlu0 %453, %v432
    %v455 = vpop.permute.xlu0 %454
    %458 = vset.pattern.permute.xlu0 0
    %459 = vperm.xlu0 %458, %v433
    %v460 = vpop.permute.xlu0 %459
    %v462 = vmul.f32 %v329, %v445
    %v463 = vmul.f32 %v330, %v450
    %v464 = vmul.f32 %v331, %v455
    %v465 = vmul.f32 %v332, %v460
    %467 = vset.pattern.permute.xlu0 0
    %468 = vperm.xlu0 %467, %v438
    %v469 = vpop.permute.xlu0 %468
    %472 = vset.pattern.permute.xlu0 0
    %473 = vperm.xlu0 %472, %v439
    %v474 = vpop.permute.xlu0 %473
    %477 = vset.pattern.permute.xlu0 0
    %478 = vperm.xlu0 %477, %v440
    %v479 = vpop.permute.xlu0 %478
    %482 = vset.pattern.permute.xlu0 0
    %483 = vperm.xlu0 %482, %v441
    %v484 = vpop.permute.xlu0 %483
    %v486 = vadd.f32 %v462, %v469
    %v487 = vadd.f32 %v463, %v474
    %v488 = vadd.f32 %v464, %v479
    %v489 = vadd.f32 %v465, %v484
    %v490 = vmax.f32 %v486, 0.0
    %v491 = vmax.f32 %v487, 0.0
    %v492 = vmax.f32 %v488, 0.0
    %v493 = vmax.f32 %v489, 0.0
    %v494 = vpack.c.bf16 %v491, %v490
    %v495 = vpack.c.bf16 %v493, %v492
    %v500 = vunpack.c.l.b16 %v37
    %v501 = vunpack.c.l.b16 %v38
    %v502 = vunpack.c.l.b16 %v39
    %v503 = vunpack.c.l.b16 %v40
    %v504 = vpack.c.b16 %v501, %v500
    %v505 = vpack.c.b16 %v503, %v502
    %v507 = vsel %vm100, %v504, 0
    %v510 = vsel %vm100, %v505, 0
    %512 = vmatprep.subr.bf16.mxu0 0
    %513 = vmatpush1.bf16.msra.mxu0 0
    %514 = vmatprep.subr.bf16.mxu0 0
    %515 = vmatpush1.bf16.msra.mxu0 0
    %516 = vmatprep.subr.bf16.mxu0 0
    %517 = vmatpush1.bf16.msra.mxu0 0
    %518 = vmatprep.subr.bf16.mxu0 0
    %519 = vmatpush1.bf16.msra.mxu0 0
    %520 = vmatprep.subr.bf16.mxu0 0
    %521 = vmatpush1.bf16.msra.mxu0 0
    %522 = vmatprep.subr.bf16.mxu0 0
    %523 = vmatpush1.bf16.msra.mxu0 0
    %524 = vmatprep.subr.bf16.mxu0 0
    %525 = vmatpush1.bf16.msra.mxu0 %v495
    %526 = vmatprep.subr.bf16.mxu0 0
    %527 = vmatpush1.bf16.msra.mxu0 %v494
    %528 = vmatprep.subr.bf16.mxu0 0
    %529 = vmatpush2.bf16.msra.mxu0 0
    %530 = vmatprep.subr.bf16.mxu0 0
    %531 = vmatpush2.bf16.msra.mxu0 0
    %532 = vmatprep.subr.bf16.mxu0 0
    %533 = vmatpush2.bf16.msra.mxu0 0
    %534 = vmatprep.subr.bf16.mxu0 0
    %535 = vmatpush2.bf16.msra.mxu0 0
    %536 = vmatprep.subr.bf16.mxu0 0
    %537 = vmatpush2.bf16.msra.mxu0 0
    %538 = vmatprep.subr.bf16.mxu0 0
    %539 = vmatpush2.bf16.msra.mxu0 0
    %540 = vmatprep.subr.bf16.mxu0 0
    %541 = vmatpush2.bf16.msra.mxu0 0
    %542 = vmatprep.subr.bf16.mxu0 0
    %543 = vmatpush2.bf16.msra.mxu0 0
    %544 = vmatprep.mubr.bf16.mxu0 0
    %545 = vmatmul.mubr.bf16.gmra.mxu0 %v507
    %v546 = vpop.f32.mrf.mxu0
    %v547 = vadd.f32 0.0, %v546
    %v548 = vpop.f32.mrf.mxu0
    %v549 = vpop.f32.mrf.mxu0
    %v550 = vadd.f32 0.0, %v549
    %v551 = vpop.f32.mrf.mxu0
    %552 = vmatprep.mubr.bf16.mxu0 0
    %553 = vmatmul.mubr.bf16.gmra.mxu0 %v510
    %v554 = vpop.f32.mrf.mxu0
    %v555 = vadd.f32 0.0, %v554
    %v556 = vpop.f32.mrf.mxu0
    %v557 = vpop.f32.mrf.mxu0
    %v558 = vadd.f32 0.0, %v557
    %v559 = vpop.f32.mrf.mxu0
    %560 = vdwg.mxu0
    %v561 = vadd.f32 %v57, %v547
    %v562 = vadd.f32 %v58, %v550
    %v563 = vadd.f32 %v59, %v555
    %v564 = vadd.f32 %v60, %v558
    %v565 = vpack.c.bf16 %v562, %v561
    %v566 = vpack.c.bf16 %v564, %v563
    %v575 = vunpack.c.l.b16 %v41
    %v576 = vunpack.c.l.b16 %v42
    %v577 = vunpack.c.l.b16 %v43
    %v578 = vunpack.c.l.b16 %v44
    %v579 = vunpack.c.l.b16 %v45
    %v580 = vunpack.c.l.b16 %v46
    %v581 = vunpack.c.l.b16 %v47
    %v582 = vunpack.c.l.b16 %v48
    %v583 = vpack.c.b16 %v576, %v575
    %v584 = vpack.c.b16 %v578, %v577
    %v585 = vpack.c.b16 %v580, %v579
    %v586 = vpack.c.b16 %v582, %v581
    %v588 = vsel %vm100, %v583, 0
    %v591 = vsel %vm100, %v584, 0
    %v594 = vsel %vm100, %v585, 0
    %v597 = vsel %vm100, %v586, 0
    %599 = vmatprep.subr.bf16.mxu0 0
    %600 = vmatpush1.bf16.msra.mxu0 0
    %601 = vmatprep.subr.bf16.mxu0 0
    %602 = vmatpush1.bf16.msra.mxu0 0
    %603 = vmatprep.subr.bf16.mxu0 0
    %604 = vmatpush1.bf16.msra.mxu0 0
    %605 = vmatprep.subr.bf16.mxu0 0
    %606 = vmatpush1.bf16.msra.mxu0 0
    %607 = vmatprep.subr.bf16.mxu0 0
    %608 = vmatpush1.bf16.msra.mxu0 0
    %609 = vmatprep.subr.bf16.mxu0 0
    %610 = vmatpush1.bf16.msra.mxu0 0
    %611 = vmatprep.subr.bf16.mxu0 0
    %612 = vmatpush1.bf16.msra.mxu0 %v566
    %613 = vmatprep.subr.bf16.mxu0 0
    %614 = vmatpush1.bf16.msra.mxu0 %v565
    %615 = vmatprep.subr.bf16.mxu0 0
    %616 = vmatpush2.bf16.msra.mxu0 0
    %617 = vmatprep.subr.bf16.mxu0 0
    %618 = vmatpush2.bf16.msra.mxu0 0
    %619 = vmatprep.subr.bf16.mxu0 0
    %620 = vmatpush2.bf16.msra.mxu0 0
    %621 = vmatprep.subr.bf16.mxu0 0
    %622 = vmatpush2.bf16.msra.mxu0 0
    %623 = vmatprep.subr.bf16.mxu0 0
    %624 = vmatpush2.bf16.msra.mxu0 0
    %625 = vmatprep.subr.bf16.mxu0 0
    %626 = vmatpush2.bf16.msra.mxu0 0
    %627 = vmatprep.subr.bf16.mxu0 0
    %628 = vmatpush2.bf16.msra.mxu0 0
    %629 = vmatprep.subr.bf16.mxu0 0
    %630 = vmatpush2.bf16.msra.mxu0 0
    %631 = vmatprep.mubr.bf16.mxu0 0
    %632 = vmatmul.mubr.bf16.gmra.mxu0 %v588
    %v633 = vpop.f32.mrf.mxu0
    %v634 = vadd.f32 0.0, %v633
    %v635 = vpop.f32.mrf.mxu0
    %v636 = vpop.f32.mrf.mxu0
    %v637 = vadd.f32 0.0, %v636
    %v638 = vpop.f32.mrf.mxu0
    %639 = vmatprep.mubr.bf16.mxu0 0
    %640 = vmatmul.mubr.bf16.gmra.mxu0 %v591
    %v641 = vpop.f32.mrf.mxu0
    %v642 = vadd.f32 0.0, %v641
    %v643 = vpop.f32.mrf.mxu0
    %v644 = vpop.f32.mrf.mxu0
    %v645 = vadd.f32 0.0, %v644
    %v646 = vpop.f32.mrf.mxu0
    %647 = vmatprep.mubr.bf16.mxu0 0
    %648 = vmatmul.mubr.bf16.gmra.mxu0 %v594
    %v649 = vpop.f32.mrf.mxu0
    %v650 = vadd.f32 0.0, %v649
    %v651 = vpop.f32.mrf.mxu0
    %v652 = vpop.f32.mrf.mxu0
    %v653 = vadd.f32 0.0, %v652
    %v654 = vpop.f32.mrf.mxu0
    %655 = vmatprep.mubr.bf16.mxu0 0
    %656 = vmatmul.mubr.bf16.gmra.mxu0 %v597
    %v657 = vpop.f32.mrf.mxu0
    %v658 = vadd.f32 0.0, %v657
    %v659 = vpop.f32.mrf.mxu0
    %v660 = vpop.f32.mrf.mxu0
    %v661 = vadd.f32 0.0, %v660
    %v662 = vpop.f32.mrf.mxu0
    %663 = vdwg.mxu0
    %664 = vst [vmem:[#allocation2] sm:$0xff] %v634
    %665 = vst [vmem:[#allocation2 + $0x8] sm:$0xff] %v637
    %666 = vst [vmem:[#allocation2 + $0x10] sm:$0xff] %v642
    %667 = vst [vmem:[#allocation2 + $0x18] sm:$0xff] %v645
    %668 = vst [vmem:[#allocation2 + $0x20] sm:$0xff] %v650
    %669 = vst [vmem:[#allocation2 + $0x28] sm:$0xff] %v653
    %670 = vst [vmem:[#allocation2 + $0x30] sm:$0xff] %v658
    %671 = vst [vmem:[#allocation2 + $0x38] sm:$0xff] %v661
    %672 = vadd.xlane.f32.xlu0 %v381
    %v673 = vpop.xlane.xlu0 %672
    %674 = vadd.xlane.f32.xlu0 %v382
    %v675 = vpop.xlane.xlu0 %674
    %676 = vadd.xlane.f32.xlu0 %v383
    %v677 = vpop.xlane.xlu0 %676
    %678 = vadd.xlane.f32.xlu0 %v384
    %v679 = vpop.xlane.xlu0 %678
    %v680 = vadd.f32 %v673, %v675
    %v681 = vadd.f32 %v680, %v677
    %v682 = vadd.f32 %v681, %v679
    %v683 = vrot.slane %v682, 4
    %v684 = vadd.f32 %v682, %v683
    %v685 = vrot.slane %v684, 2
    %v686 = vadd.f32 %v684, %v685
    %v687 = vrot.slane %v686, 1
    %v688 = vadd.f32 %v686, %v687
    %v689 = vmul.f32 %v688, 0.0009765625
    %v690 = vmul.f32 %v381, %v381
    %v691 = vmul.f32 %v382, %v382
    %v692 = vmul.f32 %v383, %v383
    %v693 = vmul.f32 %v384, %v384
    %694 = vadd.xlane.f32.xlu0 %v690
    %v695 = vpop.xlane.xlu0 %694
    %696 = vadd.xlane.f32.xlu0 %v691
    %v697 = vpop.xlane.xlu0 %696
    %698 = vadd.xlane.f32.xlu0 %v692
    %v699 = vpop.xlane.xlu0 %698
    %700 = vadd.xlane.f32.xlu0 %v693
    %v701 = vpop.xlane.xlu0 %700
    %v702 = vadd.f32 %v695, %v697
    %v703 = vadd.f32 %v702, %v699
    %v704 = vadd.f32 %v703, %v701
    %v705 = vrot.slane %v704, 4
    %v706 = vadd.f32 %v704, %v705
    %v707 = vrot.slane %v706, 2
    %v708 = vadd.f32 %v706, %v707
    %v709 = vrot.slane %v708, 1
    %v710 = vadd.f32 %v708, %v709
    %v711 = vmul.f32 %v710, 0.0009765625
    %v712 = vmul.f32 %v689, %v689
    %v713 = vsub.f32 %v711, %v712
    %v714 = vmax.f32 %v713, 0.0
    %v715 = vadd.f32 %v714, 1e-05
    %v716 = vrsqrt.pop %v715
    %v717 = vmul.f32 %v716, %v49
    %v718 = vmul.f32 %v716, %v50
    %v719 = vmul.f32 %v716, %v51
    %v720 = vmul.f32 %v716, %v52
    %v721 = vmul.f32 %v689, %v717
    %v722 = vmul.f32 %v689, %v718
    %v723 = vmul.f32 %v689, %v719
    %v724 = vmul.f32 %v689, %v720
    %v725 = vsub.f32 %v53, %v721
    %v726 = vsub.f32 %v54, %v722
    %v727 = vsub.f32 %v55, %v723
    %v728 = vsub.f32 %v56, %v724
    %730 = vset.pattern.permute.xlu0 0
    %731 = vperm.xlu0 %730, %v717
    %v732 = vpop.permute.xlu0 %731
    %735 = vset.pattern.permute.xlu0 0
    %736 = vperm.xlu0 %735, %v718
    %v737 = vpop.permute.xlu0 %736
    %740 = vset.pattern.permute.xlu0 0
    %741 = vperm.xlu0 %740, %v719
    %v742 = vpop.permute.xlu0 %741
    %745 = vset.pattern.permute.xlu0 0
    %746 = vperm.xlu0 %745, %v720
    %v747 = vpop.permute.xlu0 %746
    %v749 = vmul.f32 %v381, %v732
    %v750 = vmul.f32 %v382, %v737
    %v751 = vmul.f32 %v383, %v742
    %v752 = vmul.f32 %v384, %v747
    %754 = vset.pattern.permute.xlu0 0
    %755 = vperm.xlu0 %754, %v725
    %v756 = vpop.permute.xlu0 %755
    %759 = vset.pattern.permute.xlu0 0
    %760 = vperm.xlu0 %759, %v726
    %v761 = vpop.permute.xlu0 %760
    %764 = vset.pattern.permute.xlu0 0
    %765 = vperm.xlu0 %764, %v727
    %v766 = vpop.permute.xlu0 %765
    %769 = vset.pattern.permute.xlu0 0
    %770 = vperm.xlu0 %769, %v728
    %v771 = vpop.permute.xlu0 %770
    %v773 = vadd.f32 %v749, %v756
    %v774 = vadd.f32 %v750, %v761
    %v775 = vadd.f32 %v751, %v766
    %v776 = vadd.f32 %v752, %v771
    %v777 = vmax.f32 %v773, 0.0
    %v778 = vmax.f32 %v774, 0.0
    %v779 = vmax.f32 %v775, 0.0
    %v780 = vmax.f32 %v776, 0.0
    %v781 = vpack.c.bf16 %v778, %v777
    %v782 = vpack.c.bf16 %v780, %v779
    %783 = vmatprep.subr.bf16.mxu0 0
    %784 = vmatpush1.bf16.msra.mxu0 0
    %785 = vmatprep.subr.bf16.mxu0 0
    %786 = vmatpush1.bf16.msra.mxu0 0
    %787 = vmatprep.subr.bf16.mxu0 0
    %788 = vmatpush1.bf16.msra.mxu0 0
    %789 = vmatprep.subr.bf16.mxu0 0
    %790 = vmatpush1.bf16.msra.mxu0 0
    %791 = vmatprep.subr.bf16.mxu0 0
    %792 = vmatpush1.bf16.msra.mxu0 0
    %793 = vmatprep.subr.bf16.mxu0 0
    %794 = vmatpush1.bf16.msra.mxu0 0
    %795 = vmatprep.subr.bf16.mxu0 0
    %796 = vmatpush1.bf16.msra.mxu0 %v782
    %797 = vmatprep.subr.bf16.mxu0 0
    %798 = vmatpush1.bf16.msra.mxu0 %v781
    %799 = vmatprep.subr.bf16.mxu0 0
    %800 = vmatpush2.bf16.msra.mxu0 0
    %801 = vmatprep.subr.bf16.mxu0 0
    %802 = vmatpush2.bf16.msra.mxu0 0
    %803 = vmatprep.subr.bf16.mxu0 0
    %804 = vmatpush2.bf16.msra.mxu0 0
    %805 = vmatprep.subr.bf16.mxu0 0
    %806 = vmatpush2.bf16.msra.mxu0 0
    %807 = vmatprep.subr.bf16.mxu0 0
    %808 = vmatpush2.bf16.msra.mxu0 0
    %809 = vmatprep.subr.bf16.mxu0 0
    %810 = vmatpush2.bf16.msra.mxu0 0
    %811 = vmatprep.subr.bf16.mxu0 0
    %812 = vmatpush2.bf16.msra.mxu0 0
    %813 = vmatprep.subr.bf16.mxu0 0
    %814 = vmatpush2.bf16.msra.mxu0 0
    %815 = vmatprep.mubr.bf16.mxu0 0
    %816 = vmatmul.mubr.bf16.gmra.mxu0 %v507
    %v817 = vpop.f32.mrf.mxu0
    %v818 = vadd.f32 0.0, %v817
    %v819 = vpop.f32.mrf.mxu0
    %v820 = vpop.f32.mrf.mxu0
    %v821 = vadd.f32 0.0, %v820
    %v822 = vpop.f32.mrf.mxu0
    %823 = vmatprep.mubr.bf16.mxu0 0
    %824 = vmatmul.mubr.bf16.gmra.mxu0 %v510
    %v825 = vpop.f32.mrf.mxu0
    %v826 = vadd.f32 0.0, %v825
    %v827 = vpop.f32.mrf.mxu0
    %v828 = vpop.f32.mrf.mxu0
    %v829 = vadd.f32 0.0, %v828
    %v830 = vpop.f32.mrf.mxu0
    %831 = vdwg.mxu0
    %v832 = vadd.f32 %v62, %v818
    %v833 = vadd.f32 %v63, %v821
    %v834 = vadd.f32 %v64, %v826
    %v835 = vadd.f32 %v65, %v829
    %v836 = vpack.c.bf16 %v833, %v832
    %v837 = vpack.c.bf16 %v835, %v834
    %838 = vmatprep.subr.bf16.mxu0 0
    %839 = vmatpush1.bf16.msra.mxu0 0
    %840 = vmatprep.subr.bf16.mxu0 0
    %841 = vmatpush1.bf16.msra.mxu0 0
    %842 = vmatprep.subr.bf16.mxu0 0
    %843 = vmatpush1.bf16.msra.mxu0 0
    %844 = vmatprep.subr.bf16.mxu0 0
    %845 = vmatpush1.bf16.msra.mxu0 0
    %846 = vmatprep.subr.bf16.mxu0 0
    %847 = vmatpush1.bf16.msra.mxu0 0
    %848 = vmatprep.subr.bf16.mxu0 0
    %849 = vmatpush1.bf16.msra.mxu0 0
    %850 = vmatprep.subr.bf16.mxu0 0
    %851 = vmatpush1.bf16.msra.mxu0 %v837
    %852 = vmatprep.subr.bf16.mxu0 0
    %853 = vmatpush1.bf16.msra.mxu0 %v836
    %854 = vmatprep.subr.bf16.mxu0 0
    %855 = vmatpush2.bf16.msra.mxu0 0
    %856 = vmatprep.subr.bf16.mxu0 0
    %857 = vmatpush2.bf16.msra.mxu0 0
    %858 = vmatprep.subr.bf16.mxu0 0
    %859 = vmatpush2.bf16.msra.mxu0 0
    %860 = vmatprep.subr.bf16.mxu0 0
    %861 = vmatpush2.bf16.msra.mxu0 0
    %862 = vmatprep.subr.bf16.mxu0 0
    %863 = vmatpush2.bf16.msra.mxu0 0
    %864 = vmatprep.subr.bf16.mxu0 0
    %865 = vmatpush2.bf16.msra.mxu0 0
    %866 = vmatprep.subr.bf16.mxu0 0
    %867 = vmatpush2.bf16.msra.mxu0 0
    %868 = vmatprep.subr.bf16.mxu0 0
    %869 = vmatpush2.bf16.msra.mxu0 0
    %870 = vmatprep.mubr.bf16.mxu0 0
    %871 = vmatmul.mubr.bf16.gmra.mxu0 %v588
    %v872 = vpop.f32.mrf.mxu0
    %v873 = vadd.f32 0.0, %v872
    %v874 = vpop.f32.mrf.mxu0
    %v875 = vpop.f32.mrf.mxu0
    %v876 = vadd.f32 0.0, %v875
    %v877 = vpop.f32.mrf.mxu0
    %878 = vmatprep.mubr.bf16.mxu0 0
    %879 = vmatmul.mubr.bf16.gmra.mxu0 %v591
    %v880 = vpop.f32.mrf.mxu0
    %v881 = vadd.f32 0.0, %v880
    %v882 = vpop.f32.mrf.mxu0
    %v883 = vpop.f32.mrf.mxu0
    %v884 = vadd.f32 0.0, %v883
    %v885 = vpop.f32.mrf.mxu0
    %886 = vmatprep.mubr.bf16.mxu0 0
    %887 = vmatmul.mubr.bf16.gmra.mxu0 %v594
    %v888 = vpop.f32.mrf.mxu0
    %v889 = vadd.f32 0.0, %v888
    %v890 = vpop.f32.mrf.mxu0
    %v891 = vpop.f32.mrf.mxu0
    %v892 = vadd.f32 0.0, %v891
    %v893 = vpop.f32.mrf.mxu0
    %894 = vmatprep.mubr.bf16.mxu0 0
    %895 = vmatmul.mubr.bf16.gmra.mxu0 %v597
    %v896 = vpop.f32.mrf.mxu0
    %v897 = vadd.f32 0.0, %v896
    %v898 = vpop.f32.mrf.mxu0
    %v899 = vpop.f32.mrf.mxu0
    %v900 = vadd.f32 0.0, %v899
    %v901 = vpop.f32.mrf.mxu0
    %902 = vdwg.mxu0
    %s903 = scalar_lea.vmem [#allocation2], 64
    %904 = vst [vmem:[%s903] sm:$0xff] %v873
    %905 = vst [vmem:[%s903 + $0x8] sm:$0xff] %v876
    %906 = vst [vmem:[%s903 + $0x10] sm:$0xff] %v881
    %907 = vst [vmem:[%s903 + $0x18] sm:$0xff] %v884
    %908 = vst [vmem:[%s903 + $0x20] sm:$0xff] %v889
    %909 = vst [vmem:[%s903 + $0x28] sm:$0xff] %v892
    %910 = vst [vmem:[%s903 + $0x30] sm:$0xff] %v897
    %911 = vst [vmem:[%s903 + $0x38] sm:$0xff] %v900
    // Predicated region
    $region26: #{tpu_custom_call.1} parent=1 // pred_check
      _
    $region27: #{tpu_custom_call.1} parent=1 // pred_check_branch
      %913 = sbr.rel (0) target = $region29
    $region28: #{tpu_custom_call.1} parent=1 // pred_region
      %s915 = ssub.s32 2048, 2048
      %916 = vsyncadd [#allocation3], %s915
      %s917 = sshll.u32 [#allocation2], 4
      %s918 = int_to_ptr.vmem [resolvable:$true] %s917
      %923 = dma.vmem_to_hbm [thread:$0]  %s918, 2048, %s6, [#allocation3], 128, 128, 8
    $region29: #{tpu_custom_call.1} parent=1 // pred_fallthru
      _
    // Predicated region
    $region30: #{tpu_custom_call.1} parent=1 // pred_check
      _
    $region31: #{tpu_custom_call.1} parent=1 // pred_check_branch
      %925 = sbr.rel (0) target = $region33
    $region32: #{tpu_custom_call.1} parent=1 // pred_region
      %926 = dma.done [#allocation3], 2048
    $region33: #{tpu_custom_call.1} parent=1 // pred_fallthru
      _
    %927 = vsyncpa [#allocation3], 1

</llo_original>
